<compile_context>
chip_gen: v7x
topology: tpu7x:2x2x1
jax: 0.10.0
libtpu: 0.0.40
codegen_flags: <defaults>
</compile_context>

<pallas_src>
import jax
import jax.numpy as jnp
from jax.experimental import pallas as pl
from jax.experimental.pallas import tpu as pltpu


def _round_up(x, m):
    return (x + m - 1) // m * m


def _pad_to(a, shape):
    if tuple(a.shape) == tuple(shape):
        return a
    pads = [(0, t - s) for s, t in zip(a.shape, shape)]
    return jnp.pad(a, pads)


_SQRT_2_OVER_PI = 0.7978845608028654


def _gelu_tanh_f32(h):
    # Exactly the torch GELU module's tanh approximation, in f32.
    c = jnp.float32(_SQRT_2_OVER_PI)
    return 0.5 * h * (1.0 + jnp.tanh(c * (h + 0.044715 * (h * h * h))))


# ----------------------------------------------------------------------------
# Kernels
# ----------------------------------------------------------------------------
def _ffn_stream_kernel(x_ref, w1_ref, b1_ref, w2_ref, b2_ref, o_ref, acc_ref):
    # Streamed hidden dim: grid = (rows, H/th); H axis last + "arbitrary".
    # x_ref: (tm, E)  w1_ref: (E, th)  b1_ref: (1, th)
    # w2_ref: (th, E) b2_ref: (1, E)   o_ref: (tm, E)  acc_ref: (tm, E) f32
    j = pl.program_id(1)

    @pl.when(j == 0)
    def _init():
        acc_ref[...] = jnp.zeros_like(acc_ref)

    # First linear on a hidden-dim slab (bf16 operands, f32 MXU accumulation).
    h = jnp.dot(x_ref[...], w1_ref[...], preferred_element_type=jnp.float32)
    h = h + b1_ref[...].astype(jnp.float32)

    g = _gelu_tanh_f32(h)

    # Second linear slab: accumulate into the resident f32 accumulator.
    acc_ref[...] += jnp.dot(g.astype(w2_ref.dtype), w2_ref[...],
                            preferred_element_type=jnp.float32)

    @pl.when(j == pl.num_programs(1) - 1)
    def _finalize():
        o_ref[...] = (acc_ref[...] + b2_ref[...].astype(jnp.float32)
                      ).astype(o_ref.dtype)


def _ffn_resident_kernel(x_ref, w1_ref, b1_ref, w2_ref, b2_ref, o_ref):
    # Weights-resident fast path: grid = (rows,); full W1/W2 stay in VMEM
    # (constant index_map -> DMA'd once across all row tiles).
    h = jnp.dot(x_ref[...], w1_ref[...], preferred_element_type=jnp.float32)
    h = h + b1_ref[...].astype(jnp.float32)
    g = _gelu_tanh_f32(h)
    out = jnp.dot(g.astype(w2_ref.dtype), w2_ref[...],
                  preferred_element_type=jnp.float32)
    o_ref[...] = (out + b2_ref[...].astype(jnp.float32)).astype(o_ref.dtype)


# ----------------------------------------------------------------------------
# Per-generation configuration
# ----------------------------------------------------------------------------
def _tpu_config():
    kind = ""
    try:
        kind = jax.devices()[0].device_kind.lower()
    except Exception:
        pass
    vmem_cap = None
    try:
        info = pltpu.get_tpu_info()
        vmem_cap = getattr(info, "vmem_capacity_bytes", None)
    except Exception:
        vmem_cap = None
    looks_v7 = ("v7" in kind) or ("7x" in kind)
    if vmem_cap is None:
        vmem_cap = (64 if looks_v7 else 128) * 1024 * 1024
    small_vmem = looks_v7 or vmem_cap <= 64 * 1024 * 1024
    # Request ~80% of physical VMEM; leave headroom for compiler scratch.
    vmem_limit = int(vmem_cap * 0.80)
    if small_vmem:
        tm, th = 512, 256          # v7x: 64 MiB VMEM, 2 TensorCores
        min_row_tiles = 2          # keep both cores busy on the rows axis
    else:
        tm, th = 1024, 512         # v5e / v6e: 128 MiB VMEM
        min_row_tiles = 1
    return tm, th, vmem_limit, min_row_tiles


def _row_tiling(M, tm_max, min_row_tiles):
    """Pick (tm, M_pad) so padding waste stays small (<= 8 rows per tile)."""
    M8 = _round_up(max(M, 1), 8)
    n = max(1, -(-M8 // tm_max))
    if M8 >= 16:
        n = max(n, min_row_tiles)
    n = max(1, min(n, M8 // 8))
    tm = _round_up(-(-M8 // n), 8)
    return tm, n * tm


def _stream_bytes(tm, th, E_pad, out_bytes):
    x_io = 2 * tm * E_pad * 2 + 2 * tm * E_pad * out_bytes     # x + out (dbl-buf)
    w_io = 2 * (E_pad * th + th * E_pad) * 2 + 2 * (th + E_pad) * 4
    acc = tm * E_pad * 4                                       # f32 accumulator
    tmp = tm * th * (4 + 2)                                     # f32 h + bf16 g
    return x_io + w_io + acc + tmp


def _resident_bytes(tm, E_pad, H_pad, out_bytes):
    w = 2 * 2 * E_pad * H_pad * 2                               # W1+W2 bf16 (dbl-buf)
    x_io = 2 * tm * E_pad * 2 + 2 * tm * E_pad * out_bytes
    tmp = tm * H_pad * (4 + 2)                                  # f32 h + bf16 g
    misc = 2 * (H_pad + E_pad) * 4
    return w + x_io + tmp + misc


# ----------------------------------------------------------------------------
# Wrapper
# ----------------------------------------------------------------------------
def feed_forward(x, w1, b1, w2, b2, *, compute_dtype=jnp.bfloat16,
                 tm=None, th=None, vmem_limit_bytes=None, mode="auto"):
    """x: (B, S, E); w1: (E, H); b1: (H,); w2: (H, E); b2: (E,) -> (B, S, E)."""
    B, S, E = x.shape
    E_in, H = w1.shape
    assert E_in == E and w2.shape == (H, E) and b1.shape == (H,) and b2.shape == (E,)

    out_dtype = x.dtype
    out_bytes = jnp.dtype(out_dtype).itemsize

    tm_cfg, th_cfg, vmem_cfg, min_row_tiles = _tpu_config()
    if tm is None:
        tm = tm_cfg
    if th is None:
        th = th_cfg
    if vmem_limit_bytes is None:
        vmem_limit_bytes = vmem_cfg
    budget = int(vmem_limit_bytes * 0.9)

    M = B * S
    E_pad = _round_up(E, 128)
    th = max(128, min(_round_up(th, 128), _round_up(H, 128)))
    H_pad = _round_up(H, th)

    tm, M_pad = _row_tiling(M, tm, min_row_tiles)

    if mode == "resident":
        use_resident = True
    elif mode == "stream":
        use_resident = False
    else:
        use_resident = _resident_bytes(tm, E_pad, H_pad, out_bytes) <= budget

    if not use_resident:
        # Shrink tiles until the streamed working set fits in the VMEM budget.
        for _ in range(16):
            if _stream_bytes(tm, th, E_pad, out_bytes) <= budget:
                break
            if tm > 64:
                tm, M_pad = _row_tiling(M, max(64, tm // 2), min_row_tiles)
            elif th > 128:
                th = max(128, th // 2)
                H_pad = _round_up(H, th)
            else:
                break

    # Pad (no-op copies are skipped when already aligned) and cast operands to
    # the MXU-native compute dtype; biases stay f32.
    x2d = _pad_to(x.reshape(M, E), (M_pad, E_pad)).astype(compute_dtype)
    w1p = _pad_to(w1, (E_pad, H_pad)).astype(compute_dtype)
    w2p = _pad_to(w2, (H_pad, E_pad)).astype(compute_dtype)
    b1p = _pad_to(b1.reshape(1, H), (1, H_pad)).astype(jnp.float32)
    b2p = _pad_to(b2.reshape(1, E), (1, E_pad)).astype(jnp.float32)

    if use_resident:
        grid = (M_pad // tm,)
        out2d = pl.pallas_call(
            _ffn_resident_kernel,
            out_shape=jax.ShapeDtypeStruct((M_pad, E_pad), out_dtype),
            grid_spec=pltpu.PrefetchScalarGridSpec(
                num_scalar_prefetch=0,
                grid=grid,
                in_specs=[
                    pl.BlockSpec((tm, E_pad),    lambda i: (i, 0)),   # x row tile
                    pl.BlockSpec((E_pad, H_pad), lambda i: (0, 0)),   # W1 (resident)
                    pl.BlockSpec((1, H_pad),     lambda i: (0, 0)),   # b1
                    pl.BlockSpec((H_pad, E_pad), lambda i: (0, 0)),   # W2 (resident)
                    pl.BlockSpec((1, E_pad),     lambda i: (0, 0)),   # b2
                ],
                out_specs=pl.BlockSpec((tm, E_pad), lambda i: (i, 0)),
            ),
            compiler_params=pltpu.CompilerParams(
                dimension_semantics=("parallel",),
                vmem_limit_bytes=vmem_limit_bytes,
            ),
        )(x2d, w1p, b1p, w2p, b2p)
    else:
        grid = (M_pad // tm, H_pad // th)   # rows parallel, hidden (reduction) last
        out2d = pl.pallas_call(
            _ffn_stream_kernel,
            out_shape=jax.ShapeDtypeStruct((M_pad, E_pad), out_dtype),
            grid_spec=pltpu.PrefetchScalarGridSpec(
                num_scalar_prefetch=0,
                grid=grid,
                in_specs=[
                    pl.BlockSpec((tm, E_pad), lambda i, j: (i, 0)),   # x row tile
                    pl.BlockSpec((E_pad, th), lambda i, j: (0, j)),   # W1 slab (streams)
                    pl.BlockSpec((1, th),     lambda i, j: (0, j)),   # b1 slab
                    pl.BlockSpec((th, E_pad), lambda i, j: (j, 0)),   # W2 slab (streams)
                    pl.BlockSpec((1, E_pad),  lambda i, j: (0, 0)),   # b2 (invariant)
                ],
                out_specs=pl.BlockSpec((tm, E_pad), lambda i, j: (i, 0)),
                scratch_shapes=[pltpu.VMEM((tm, E_pad), jnp.float32)],
            ),
            compiler_params=pltpu.CompilerParams(
                dimension_semantics=("parallel", "arbitrary"),
                vmem_limit_bytes=vmem_limit_bytes,
            ),
        )(x2d, w1p, b1p, w2p, b2p)

    return out2d[:M, :E].reshape(B, S, E)


# ----------------------------------------------------------------------------
# Self-test
# ----------------------------------------------------------------------------
if __name__ == "__main__":
    key = jax.random.PRNGKey(0)

    def make_inputs(k, B, S, E):
        H = 4 * E
        kx, kw1, kb1, kw2, kb2 = jax.random.split(k, 5)
        x = jax.random.normal(kx, (B, S, E), dtype=jnp.float32)
        w1 = jax.random.normal(kw1, (E, H), dtype=jnp.float32) * 0.02
        b1 = jax.random.normal(kb1, (H,), dtype=jnp.float32) * 0.02
        w2 = jax.random.normal(kw2, (H, E), dtype=jnp.float32) * 0.02
        b2 = jax.random.normal(kb2, (E,), dtype=jnp.float32) * 0.02
        return x, w1, b1, w2, b2

    def reference(x, w1, b1, w2, b2):
        h = x @ w1 + b1
        c = jnp.float32(_SQRT_2_OVER_PI)
        g = 0.5 * h * (1.0 + jnp.tanh(c * (h + 0.044715 * h ** 3)))
        return g @ w2 + b2

    k1, k2, k3 = jax.random.split(key, 3)
    # bf16 matmul operands -> tolerances wider than pure-f32 (test artifact only).
    ATOL = RTOL = 1e-2

    # Case 1: lane-aligned shapes; auto mode selects the weights-resident path.
    x, w1, b1, w2, b2 = make_inputs(k1, 2, 8, 128)
    out = jax.block_until_ready(feed_forward(x, w1, b1, w2, b2))
    ref = reference(x, w1, b1, w2, b2)
    assert out.shape == x.shape and out.dtype == x.dtype
    assert jnp.allclose(out, ref, atol=ATOL, rtol=RTOL), "case 1 mismatch"

    # Case 2: ragged shapes (M, E, H all unaligned); force the streamed path so
    # the H-axis accumulation + padding logic is exercised.
    x, w1, b1, w2, b2 = make_inputs(k2, 2, 7, 80)
    out = jax.block_until_ready(
        feed_forward(x, w1, b1, w2, b2, mode="stream", th=128))
    ref = reference(x, w1, b1, w2, b2)
    assert out.shape == x.shape
    assert jnp.allclose(out, ref, atol=ATOL, rtol=RTOL), "case 2 mismatch"

    # Case 3: larger embed dim, auto (resident) path.
    x, w1, b1, w2, b2 = make_inputs(k3, 2, 8, 256)
    out = jax.block_until_ready(feed_forward(x, w1, b1, w2, b2))
    ref = reference(x, w1, b1, w2, b2)
    assert jnp.allclose(out, ref, atol=ATOL, rtol=RTOL), "case 3 mismatch"

    print("KERNEL_OK")
</pallas_src>

<mosaic_0001>
module attributes {stable_mosaic.version = 11 : i64} {
  func.func @_ffn_resident_kernel(%arg0: i32, %arg1: memref<16x128xbf16, #tpu.memory_space<vmem>>, %arg2: memref<128x512xbf16, #tpu.memory_space<vmem>>, %arg3: memref<1x512xf32, #tpu.memory_space<vmem>>, %arg4: memref<512x128xbf16, #tpu.memory_space<vmem>>, %arg5: memref<1x128xf32, #tpu.memory_space<vmem>>, %arg6: memref<16x128xf32, #tpu.memory_space<vmem>>) attributes {dimension_semantics = [#tpu.dimension_semantics<parallel>], iteration_bounds = array<i64: 1>, scalar_prefetch = 0 : i64, scratch_operands = 0 : i64, tpu.core_type = #tpu.core_type<tc>, window_params = [{transform_indices = @transform_0, window_bounds = array<i64: 16, 128>}, {pipeline_mode = #tpu.pipeline_mode<synchronous>, transform_indices = @transform_1, window_bounds = array<i64: 128, 512>}, {pipeline_mode = #tpu.pipeline_mode<synchronous>, transform_indices = @transform_2, window_bounds = array<i64: 1, 512>}, {pipeline_mode = #tpu.pipeline_mode<synchronous>, transform_indices = @transform_3, window_bounds = array<i64: 512, 128>}, {pipeline_mode = #tpu.pipeline_mode<synchronous>, transform_indices = @transform_4, window_bounds = array<i64: 1, 128>}, {transform_indices = @transform_5, window_bounds = array<i64: 16, 128>}]} {
    %c0 = arith.constant 0 : index
    %c0_0 = arith.constant 0 : index
    %0 = vector.load %arg1[%c0, %c0_0] : memref<16x128xbf16, #tpu.memory_space<vmem>>, vector<16x128xbf16>
    %c0_1 = arith.constant 0 : index
    %c0_2 = arith.constant 0 : index
    %1 = vector.load %arg2[%c0_1, %c0_2] : memref<128x512xbf16, #tpu.memory_space<vmem>>, vector<128x512xbf16>
    %cst = arith.constant dense<0.000000e+00> : vector<16x512xf32>
    %2 = tpu.matmul %0, %1, %cst {dimension_numbers = #tpu.dot_dimension_numbers<[1], [0], [0], [1], [0, 0, 1, 1], [], []>} : vector<16x128xbf16>, vector<128x512xbf16>, vector<16x512xf32> -> vector<16x512xf32>
    %c0_3 = arith.constant 0 : index
    %c0_4 = arith.constant 0 : index
    %3 = vector.load %arg3[%c0_3, %c0_4] : memref<1x512xf32, #tpu.memory_space<vmem>>, vector<1x512xf32>
    %4 = vector.broadcast %3 : vector<1x512xf32> to vector<16x512xf32>
    %5 = arith.addf %2, %4 : vector<16x512xf32>
    %cst_5 = arith.constant 5.000000e-01 : f32
    %6 = vector.broadcast %cst_5 : f32 to vector<16x512xf32>
    %7 = arith.mulf %6, %5 : vector<16x512xf32>
    %8 = arith.mulf %5, %5 : vector<16x512xf32>
    %9 = arith.mulf %8, %5 : vector<16x512xf32>
    %cst_6 = arith.constant 4.471500e-02 : f32
    %10 = vector.broadcast %cst_6 : f32 to vector<16x512xf32>
    %11 = arith.mulf %10, %9 : vector<16x512xf32>
    %12 = arith.addf %5, %11 : vector<16x512xf32>
    %cst_7 = arith.constant 0.797884583 : f32
    %13 = vector.broadcast %cst_7 : f32 to vector<16x512xf32>
    %14 = arith.mulf %13, %12 : vector<16x512xf32>
    %15 = math.tanh %14 : vector<16x512xf32>
    %cst_8 = arith.constant 1.000000e+00 : f32
    %16 = vector.broadcast %cst_8 : f32 to vector<16x512xf32>
    %17 = arith.addf %16, %15 : vector<16x512xf32>
    %18 = arith.mulf %7, %17 : vector<16x512xf32>
    %19 = arith.truncf %18 : vector<16x512xf32> to vector<16x512xbf16>
    %c0_9 = arith.constant 0 : index
    %c0_10 = arith.constant 0 : index
    %20 = vector.load %arg4[%c0_9, %c0_10] : memref<512x128xbf16, #tpu.memory_space<vmem>>, vector<512x128xbf16>
    %cst_11 = arith.constant dense<0.000000e+00> : vector<16x128xf32>
    %21 = tpu.matmul %19, %20, %cst_11 {dimension_numbers = #tpu.dot_dimension_numbers<[1], [0], [0], [1], [0, 0, 1, 1], [], []>} : vector<16x512xbf16>, vector<512x128xbf16>, vector<16x128xf32> -> vector<16x128xf32>
    %c0_12 = arith.constant 0 : index
    %c0_13 = arith.constant 0 : index
    %22 = vector.load %arg5[%c0_12, %c0_13] : memref<1x128xf32, #tpu.memory_space<vmem>>, vector<1x128xf32>
    %23 = vector.broadcast %22 : vector<1x128xf32> to vector<16x128xf32>
    %24 = arith.addf %21, %23 : vector<16x128xf32>
    %c0_14 = arith.constant 0 : index
    %c0_15 = arith.constant 0 : index
    %25 = vector.load %arg6[%c0_14, %c0_15] : memref<16x128xf32, #tpu.memory_space<vmem>>, vector<16x128xf32>
    tpu.vector_store %arg6[%c0_14, %c0_15], %24 {strides = array<i32>} : memref<16x128xf32, #tpu.memory_space<vmem>>, vector<16x128xf32>,
    return
  }
  func.func @transform_0(%arg0: i32) -> (i32, i32) {
    %c0_i32 = arith.constant 0 : i32
    %c0_i32_0 = arith.constant 0 : i32
    return %arg0, %c0_i32 : i32, i32
  }
  func.func @transform_1(%arg0: i32) -> (i32, i32) {
    %c0_i32 = arith.constant 0 : i32
    %c0_i32_0 = arith.constant 0 : i32
    %c0_i32_1 = arith.constant 0 : i32
    return %c0_i32, %c0_i32_0 : i32, i32
  }
  func.func @transform_2(%arg0: i32) -> (i32, i32) {
    %c0_i32 = arith.constant 0 : i32
    %c0_i32_0 = arith.constant 0 : i32
    %c0_i32_1 = arith.constant 0 : i32
    return %c0_i32, %c0_i32_0 : i32, i32
  }
  func.func @transform_3(%arg0: i32) -> (i32, i32) {
    %c0_i32 = arith.constant 0 : i32
    %c0_i32_0 = arith.constant 0 : i32
    %c0_i32_1 = arith.constant 0 : i32
    return %c0_i32, %c0_i32_0 : i32, i32
  }
  func.func @transform_4(%arg0: i32) -> (i32, i32) {
    %c0_i32 = arith.constant 0 : i32
    %c0_i32_0 = arith.constant 0 : i32
    %c0_i32_1 = arith.constant 0 : i32
    return %c0_i32, %c0_i32_0 : i32, i32
  }
  func.func @transform_5(%arg0: i32) -> (i32, i32) {
    %c0_i32 = arith.constant 0 : i32
    %c0_i32_0 = arith.constant 0 : i32
    return %arg0, %c0_i32 : i32, i32
  }
}

</mosaic_0001>

<llo_original>
// kernel: tpu_custom_call.1
$region0: #{tpu_custom_call.1}
  #allocation0 [shape = 'u32[]', space=smem, size = 0x4, offset = 0x4, fixed_abs, tag = 'smem constant byte address 0x4 - core index']
  #allocation1 [shape = 'u32[144,128]{1,0:T(1,128)}', space=vmem, size = 0x12000, scoped, tag = 'internal scratch']
  %s0 = inlined_call_operand.hbm [shape: bf16[16,128], index: 0, kind: input, shape index: {}]
  %s1 = inlined_call_operand.hbm [shape: bf16[128,512], index: 1, kind: input, shape index: {}]
  %s2 = inlined_call_operand.hbm [shape: f32[1,512], index: 2, kind: input, shape index: {}]
  %s3 = inlined_call_operand.hbm [shape: bf16[512,128], index: 3, kind: input, shape index: {}]
  %s4 = inlined_call_operand.hbm [shape: f32[1,128], index: 4, kind: input, shape index: {}]
  %s5 = inlined_call_operand.hbm [shape: f32[16,128], index: 5, kind: output, shape index: {}]
  %s6 = sld [smem:[#allocation0]]
  $region50: #{tpu_custom_call.1} parent=0
    _
  %s8 = ssub.s32 1, %s6
  %s9 = scalar_select 0, %s8, %s6
  $region1: #{tpu_custom_call.1} parent=0
    #allocation2 [shape = 'u8[4096]{0}', space=vmem, size = 0x1000, scoped, tag = 'input window, operand 0, single buffered']
    #allocation3 [shape = 's32[1]{0}', space=sflag, size = 0x4, scoped, tag = 'scoped memory for tpu_custom_call.1']
    #allocation4 [shape = 's32[1]{0}', space=sflag, size = 0x4, scoped, tag = 'scoped memory for tpu_custom_call.1']
    #allocation5 [shape = 'u8[131072]{0}', space=vmem, size = 0x20000, scoped, tag = 'input window, operand 1, single buffered']
    #allocation6 [shape = 's32[1]{0}', space=sflag, size = 0x4, scoped, tag = 'scoped memory for tpu_custom_call.1']
    #allocation7 [shape = 'u8[2048]{0}', space=vmem, size = 0x800, scoped, tag = 'input window, operand 2, single buffered']
    #allocation8 [shape = 'u8[131072]{0}', space=vmem, size = 0x20000, scoped, tag = 'input window, operand 3, single buffered']
    #allocation9 [shape = 's32[1]{0}', space=sflag, size = 0x4, scoped, tag = 'scoped memory for tpu_custom_call.1']
    #allocation10 [shape = 'u8[512]{0}', space=vmem, size = 0x400, scoped, tag = 'input window, operand 4, single buffered']
    #allocation11 [shape = 'u8[8192]{0}', space=vmem, size = 0x2000, scoped, tag = 'output window, operand 0, single buffered']
    %10 = vsyncpa [#allocation3], 0
    %11 = vsyncpa [#allocation6], 0
    %12 = vsyncpa [#allocation9], 0
    %13 = vsyncpa [#allocation4], 0
    // Predicated region
    $region2: #{tpu_custom_call.1} parent=1 // pred_check
      _
    $region3: #{tpu_custom_call.1} parent=1 // pred_check_branch
      %15 = sbr.rel (0) target = $region5
    $region4: #{tpu_custom_call.1} parent=1 // pred_region
      %s17 = ssub.s32 128, 128
      %18 = vsyncadd [#allocation3], %s17
      %s19 = sshll.u32 [#allocation2], 4
      %s20 = int_to_ptr.vmem [resolvable:$true] %s19
      %25 = dma.hbm_to_vmem [thread:$0]  %s0, 128, %s20, [#allocation3], 64, 64, 4
    $region5: #{tpu_custom_call.1} parent=1 // pred_fallthru
      _
    // Predicated region
    $region6: #{tpu_custom_call.1} parent=1 // pred_check
      _
    $region7: #{tpu_custom_call.1} parent=1 // pred_check_branch
      %27 = sbr.rel (0) target = $region9
    $region8: #{tpu_custom_call.1} parent=1 // pred_region
      %s29 = ssub.s32 4096, 4096
      %30 = vsyncadd [#allocation6], %s29
      %s31 = sshll.u32 [#allocation5], 4
      %s32 = int_to_ptr.vmem [resolvable:$true] %s31
      %37 = dma.hbm_to_vmem [thread:$0]  %s1, 4096, %s32, [#allocation6], 256, 256, 16
    $region9: #{tpu_custom_call.1} parent=1 // pred_fallthru
      _
    // Predicated region
    $region10: #{tpu_custom_call.1} parent=1 // pred_check
      _
    $region11: #{tpu_custom_call.1} parent=1 // pred_check_branch
      %39 = sbr.rel (0) target = $region13
    $region12: #{tpu_custom_call.1} parent=1 // pred_region
      %s41 = ssub.s32 64, 64
      %42 = vsyncadd [#allocation6], %s41
      %s44 = sshll.u32 [#allocation7], 4
      %s45 = int_to_ptr.vmem [resolvable:$true] %s44
      %47 = dma.hbm_to_vmem [thread:$0]  %s2, 64, %s45, [#allocation6]
    $region13: #{tpu_custom_call.1} parent=1 // pred_fallthru
      _
    // Predicated region
    $region14: #{tpu_custom_call.1} parent=1 // pred_check
      _
    $region15: #{tpu_custom_call.1} parent=1 // pred_check_branch
      %49 = sbr.rel (0) target = $region17
    $region16: #{tpu_custom_call.1} parent=1 // pred_region
      %s51 = ssub.s32 4096, 4096
      %52 = vsyncadd [#allocation9], %s51
      %s53 = sshll.u32 [#allocation8], 4
      %s54 = int_to_ptr.vmem [resolvable:$true] %s53
      %59 = dma.hbm_to_vmem [thread:$0]  %s3, 4096, %s54, [#allocation9], 64, 64, 4
    $region17: #{tpu_custom_call.1} parent=1 // pred_fallthru
      _
    // Predicated region
    $region18: #{tpu_custom_call.1} parent=1 // pred_check
      _
    $region19: #{tpu_custom_call.1} parent=1 // pred_check_branch
      %61 = sbr.rel (0) target = $region21
    $region20: #{tpu_custom_call.1} parent=1 // pred_region
      %s63 = ssub.s32 16, 16
      %64 = vsyncadd [#allocation9], %s63
      %s66 = sshll.u32 [#allocation10], 4
      %s67 = int_to_ptr.vmem [resolvable:$true] %s66
      %69 = dma.hbm_to_vmem [thread:$0]  %s4, 16, %s67, [#allocation9]
    $region21: #{tpu_custom_call.1} parent=1 // pred_fallthru
      _
    // Predicated region
    $region22: #{tpu_custom_call.1} parent=1 // pred_check
      _
    $region23: #{tpu_custom_call.1} parent=1 // pred_check_branch
      %71 = sbr.rel (0) target = $region25
    $region24: #{tpu_custom_call.1} parent=1 // pred_region
      %72 = dma.done [#allocation3], 128
    $region25: #{tpu_custom_call.1} parent=1 // pred_fallthru
      _
    // Predicated region
    $region26: #{tpu_custom_call.1} parent=1 // pred_check
      _
    $region27: #{tpu_custom_call.1} parent=1 // pred_check_branch
      %74 = sbr.rel (0) target = $region29
    $region28: #{tpu_custom_call.1} parent=1 // pred_region
      %75 = dma.done [#allocation6], 4096
    $region29: #{tpu_custom_call.1} parent=1 // pred_fallthru
      _
    // Predicated region
    $region30: #{tpu_custom_call.1} parent=1 // pred_check
      _
    $region31: #{tpu_custom_call.1} parent=1 // pred_check_branch
      %77 = sbr.rel (0) target = $region33
    $region32: #{tpu_custom_call.1} parent=1 // pred_region
      %78 = dma.done [#allocation6], 64
    $region33: #{tpu_custom_call.1} parent=1 // pred_fallthru
      _
    // Predicated region
    $region34: #{tpu_custom_call.1} parent=1 // pred_check
      _
    $region35: #{tpu_custom_call.1} parent=1 // pred_check_branch
      %80 = sbr.rel (0) target = $region37
    $region36: #{tpu_custom_call.1} parent=1 // pred_region
      %81 = dma.done [#allocation9], 4096
    $region37: #{tpu_custom_call.1} parent=1 // pred_fallthru
      _
    // Predicated region
    $region38: #{tpu_custom_call.1} parent=1 // pred_check
      _
    $region39: #{tpu_custom_call.1} parent=1 // pred_check_branch
      %83 = sbr.rel (0) target = $region41
    $region40: #{tpu_custom_call.1} parent=1 // pred_region
      %84 = dma.done [#allocation9], 16
    $region41: #{tpu_custom_call.1} parent=1 // pred_fallthru
      _
    %v86 = vld [vmem:[#allocation2] sm:$0xf]
    %v87 = vld [vmem:[#allocation2 + $0x4] sm:$0xf]
    %v88 = vld [vmem:[#allocation5] sm:$0xff]
    %v89 = vld [vmem:[#allocation5 + $0x8] sm:$0xff]
    %v90 = vld [vmem:[#allocation5 + $0x10] sm:$0xff]
    %v91 = vld [vmem:[#allocation5 + $0x18] sm:$0xff]
    %v92 = vld [vmem:[#allocation5 + $0x20] sm:$0xff]
    %v93 = vld [vmem:[#allocation5 + $0x28] sm:$0xff]
    %v94 = vld [vmem:[#allocation5 + $0x30] sm:$0xff]
    %v95 = vld [vmem:[#allocation5 + $0x38] sm:$0xff]
    %v96 = vld [vmem:[#allocation5 + $0x40] sm:$0xff]
    %v97 = vld [vmem:[#allocation5 + $0x48] sm:$0xff]
    %v98 = vld [vmem:[#allocation5 + $0x50] sm:$0xff]
    %v99 = vld [vmem:[#allocation5 + $0x58] sm:$0xff]
    %v100 = vld [vmem:[#allocation5 + $0x60] sm:$0xff]
    %v101 = vld [vmem:[#allocation5 + $0x68] sm:$0xff]
    %v102 = vld [vmem:[#allocation5 + $0x70] sm:$0xff]
    %v103 = vld [vmem:[#allocation5 + $0x78] sm:$0xff]
    %v104 = vld [vmem:[#allocation5 + $0x80] sm:$0xff]
    %v105 = vld [vmem:[#allocation5 + $0x88] sm:$0xff]
    %v106 = vld [vmem:[#allocation5 + $0x90] sm:$0xff]
    %v107 = vld [vmem:[#allocation5 + $0x98] sm:$0xff]
    %v108 = vld [vmem:[#allocation5 + $0xa0] sm:$0xff]
    %v109 = vld [vmem:[#allocation5 + $0xa8] sm:$0xff]
    %v110 = vld [vmem:[#allocation5 + $0xb0] sm:$0xff]
    %v111 = vld [vmem:[#allocation5 + $0xb8] sm:$0xff]
    %v112 = vld [vmem:[#allocation5 + $0xc0] sm:$0xff]
    %v113 = vld [vmem:[#allocation5 + $0xc8] sm:$0xff]
    %v114 = vld [vmem:[#allocation5 + $0xd0] sm:$0xff]
    %v115 = vld [vmem:[#allocation5 + $0xd8] sm:$0xff]
    %v116 = vld [vmem:[#allocation5 + $0xe0] sm:$0xff]
    %v117 = vld [vmem:[#allocation5 + $0xe8] sm:$0xff]
    %v118 = vld [vmem:[#allocation5 + $0xf0] sm:$0xff]
    %v119 = vld [vmem:[#allocation5 + $0xf8] sm:$0xff]
    %v120 = vld [vmem:[#allocation7] sm:$0xf]
    %v122 = vlaneseq
    %v123 = vshrl.u32 %v122, 7
    %v124 = vsub.s32 0, %v123
    %v125 = vrot.slane %v120, %v124
    %v126 = vlaneseq
    %v127 = vshrl.u32 %v126, 7
    %v128 = vsub.s32 1, %v127
    %v129 = vrot.slane %v120, %v128
    %v130 = vlaneseq
    %v131 = vshrl.u32 %v130, 7
    %v132 = vsub.s32 2, %v131
    %v133 = vrot.slane %v120, %v132
    %v134 = vlaneseq
    %v135 = vshrl.u32 %v134, 7
    %v136 = vsub.s32 3, %v135
    %v137 = vrot.slane %v120, %v136
    %v144 = vunpack.c.l.b16 %v86
    %v145 = vunpack.c.l.b16 %v87
    %v146 = vpack.c.b16 %v145, %v144
    %v180 = vunpack.c.l.b16 %v88
    %v181 = vunpack.c.h.b16 %v88
    %v182 = vunpack.c.l.b16 %v89
    %v183 = vunpack.c.h.b16 %v89
    %v184 = vunpack.c.l.b16 %v90
    %v185 = vunpack.c.h.b16 %v90
    %v186 = vunpack.c.l.b16 %v91
    %v187 = vunpack.c.h.b16 %v91
    %v188 = vunpack.c.l.b16 %v92
    %v189 = vunpack.c.h.b16 %v92
    %v190 = vunpack.c.l.b16 %v93
    %v191 = vunpack.c.h.b16 %v93
    %v192 = vunpack.c.l.b16 %v94
    %v193 = vunpack.c.h.b16 %v94
    %v194 = vunpack.c.l.b16 %v95
    %v195 = vunpack.c.h.b16 %v95
    %v196 = vunpack.c.l.b16 %v96
    %v197 = vunpack.c.h.b16 %v96
    %v198 = vunpack.c.l.b16 %v97
    %v199 = vunpack.c.h.b16 %v97
    %v200 = vunpack.c.l.b16 %v98
    %v201 = vunpack.c.h.b16 %v98
    %v202 = vunpack.c.l.b16 %v99
    %v203 = vunpack.c.h.b16 %v99
    %v204 = vunpack.c.l.b16 %v100
    %v205 = vunpack.c.h.b16 %v100
    %v206 = vunpack.c.l.b16 %v101
    %v207 = vunpack.c.h.b16 %v101
    %v208 = vunpack.c.l.b16 %v102
    %v209 = vunpack.c.h.b16 %v102
    %v210 = vunpack.c.l.b16 %v103
    %v211 = vunpack.c.h.b16 %v103
    %v212 = vunpack.c.l.b16 %v104
    %v213 = vunpack.c.h.b16 %v104
    %v214 = vunpack.c.l.b16 %v105
    %v215 = vunpack.c.h.b16 %v105
    %v216 = vunpack.c.l.b16 %v106
    %v217 = vunpack.c.h.b16 %v106
    %v218 = vunpack.c.l.b16 %v107
    %v219 = vunpack.c.h.b16 %v107
    %v220 = vunpack.c.l.b16 %v108
    %v221 = vunpack.c.h.b16 %v108
    %v222 = vunpack.c.l.b16 %v109
    %v223 = vunpack.c.h.b16 %v109
    %v224 = vunpack.c.l.b16 %v110
    %v225 = vunpack.c.h.b16 %v110
    %v226 = vunpack.c.l.b16 %v111
    %v227 = vunpack.c.h.b16 %v111
    %v228 = vunpack.c.l.b16 %v112
    %v229 = vunpack.c.h.b16 %v112
    %v230 = vunpack.c.l.b16 %v113
    %v231 = vunpack.c.h.b16 %v113
    %v232 = vunpack.c.l.b16 %v114
    %v233 = vunpack.c.h.b16 %v114
    %v234 = vunpack.c.l.b16 %v115
    %v235 = vunpack.c.h.b16 %v115
    %v236 = vunpack.c.l.b16 %v116
    %v237 = vunpack.c.h.b16 %v116
    %v238 = vunpack.c.l.b16 %v117
    %v239 = vunpack.c.h.b16 %v117
    %v240 = vunpack.c.l.b16 %v118
    %v241 = vunpack.c.h.b16 %v118
    %v242 = vunpack.c.l.b16 %v119
    %v243 = vunpack.c.h.b16 %v119
    %v244 = vpack.c.b16 %v184, %v180
    %v245 = vpack.c.b16 %v185, %v181
    %v246 = vpack.c.b16 %v186, %v182
    %v247 = vpack.c.b16 %v187, %v183
    %v248 = vpack.c.b16 %v192, %v188
    %v249 = vpack.c.b16 %v193, %v189
    %v250 = vpack.c.b16 %v194, %v190
    %v251 = vpack.c.b16 %v195, %v191
    %v252 = vpack.c.b16 %v200, %v196
    %v253 = vpack.c.b16 %v201, %v197
    %v254 = vpack.c.b16 %v202, %v198
    %v255 = vpack.c.b16 %v203, %v199
    %v256 = vpack.c.b16 %v208, %v204
    %v257 = vpack.c.b16 %v209, %v205
    %v258 = vpack.c.b16 %v210, %v206
    %v259 = vpack.c.b16 %v211, %v207
    %v260 = vpack.c.b16 %v216, %v212
    %v261 = vpack.c.b16 %v217, %v213
    %v262 = vpack.c.b16 %v218, %v214
    %v263 = vpack.c.b16 %v219, %v215
    %v264 = vpack.c.b16 %v224, %v220
    %v265 = vpack.c.b16 %v225, %v221
    %v266 = vpack.c.b16 %v226, %v222
    %v267 = vpack.c.b16 %v227, %v223
    %v268 = vpack.c.b16 %v232, %v228
    %v269 = vpack.c.b16 %v233, %v229
    %v270 = vpack.c.b16 %v234, %v230
    %v271 = vpack.c.b16 %v235, %v231
    %v272 = vpack.c.b16 %v240, %v236
    %v273 = vpack.c.b16 %v241, %v237
    %v274 = vpack.c.b16 %v242, %v238
    %v275 = vpack.c.b16 %v243, %v239
    %308 = vmatprep.subr.bf16.mxu0 %v245
    %309 = vmatpush1.bf16.msra.mxu0 %v244
    %310 = vmatprep.subr.bf16.mxu0 %v249
    %311 = vmatpush1.bf16.msra.mxu0 %v248
    %312 = vmatprep.subr.bf16.mxu0 %v253
    %313 = vmatpush1.bf16.msra.mxu0 %v252
    %314 = vmatprep.subr.bf16.mxu0 %v257
    %315 = vmatpush1.bf16.msra.mxu0 %v256
    %316 = vmatprep.subr.bf16.mxu0 %v261
    %317 = vmatpush1.bf16.msra.mxu0 %v260
    %318 = vmatprep.subr.bf16.mxu0 %v265
    %319 = vmatpush1.bf16.msra.mxu0 %v264
    %320 = vmatprep.subr.bf16.mxu0 %v269
    %321 = vmatpush1.bf16.msra.mxu0 %v268
    %322 = vmatprep.subr.bf16.mxu0 %v273
    %323 = vmatpush1.bf16.msra.mxu0 %v272
    %324 = vmatprep.subr.bf16.mxu0 0
    %325 = vmatpush1.bf16.msra.mxu0 0
    %326 = vmatprep.subr.bf16.mxu0 0
    %327 = vmatpush1.bf16.msra.mxu0 0
    %328 = vmatprep.subr.bf16.mxu0 0
    %329 = vmatpush1.bf16.msra.mxu0 0
    %330 = vmatprep.subr.bf16.mxu0 0
    %331 = vmatpush1.bf16.msra.mxu0 0
    %332 = vmatprep.subr.bf16.mxu0 0
    %333 = vmatpush1.bf16.msra.mxu0 0
    %334 = vmatprep.subr.bf16.mxu0 0
    %335 = vmatpush1.bf16.msra.mxu0 0
    %336 = vmatprep.subr.bf16.mxu0 0
    %337 = vmatpush1.bf16.msra.mxu0 0
    %338 = vmatprep.subr.bf16.mxu0 0
    %339 = vmatpush1.bf16.msra.mxu0 0
    %340 = vmatprep.mubr.bf16.mxu0 0
    %341 = vmatmul.mubr.bf16.gmra.mrb[0].mxu0 %v146
    %v342 = vpop.f32.mrb[0].mxu0
    %v343 = vadd.f32 %v125, %v342
    %v344 = vpop.f32.mrb[0].mxu0
    %v345 = vadd.f32 %v129, %v344
    %v346 = vpop.f32.mrb[0].mxu0
    %v347 = vadd.f32 %v125, %v346
    %v348 = vpop.f32.mrb[0].mxu0
    %v349 = vadd.f32 %v129, %v348
    %350 = vdwg.mxu0
    %351 = vmatprep.subr.bf16.mxu0 %v247
    %352 = vmatpush1.bf16.msra.mxu0 %v246
    %353 = vmatprep.subr.bf16.mxu0 %v251
    %354 = vmatpush1.bf16.msra.mxu0 %v250
    %355 = vmatprep.subr.bf16.mxu0 %v255
    %356 = vmatpush1.bf16.msra.mxu0 %v254
    %357 = vmatprep.subr.bf16.mxu0 %v259
    %358 = vmatpush1.bf16.msra.mxu0 %v258
    %359 = vmatprep.subr.bf16.mxu0 %v263
    %360 = vmatpush1.bf16.msra.mxu0 %v262
    %361 = vmatprep.subr.bf16.mxu0 %v267
    %362 = vmatpush1.bf16.msra.mxu0 %v266
    %363 = vmatprep.subr.bf16.mxu0 %v271
    %364 = vmatpush1.bf16.msra.mxu0 %v270
    %365 = vmatprep.subr.bf16.mxu0 %v275
    %366 = vmatpush1.bf16.msra.mxu0 %v274
    %367 = vmatprep.subr.bf16.mxu0 0
    %368 = vmatpush1.bf16.msra.mxu0 0
    %369 = vmatprep.subr.bf16.mxu0 0
    %370 = vmatpush1.bf16.msra.mxu0 0
    %371 = vmatprep.subr.bf16.mxu0 0
    %372 = vmatpush1.bf16.msra.mxu0 0
    %373 = vmatprep.subr.bf16.mxu0 0
    %374 = vmatpush1.bf16.msra.mxu0 0
    %375 = vmatprep.subr.bf16.mxu0 0
    %376 = vmatpush1.bf16.msra.mxu0 0
    %377 = vmatprep.subr.bf16.mxu0 0
    %378 = vmatpush1.bf16.msra.mxu0 0
    %379 = vmatprep.subr.bf16.mxu0 0
    %380 = vmatpush1.bf16.msra.mxu0 0
    %381 = vmatprep.subr.bf16.mxu0 0
    %382 = vmatpush1.bf16.msra.mxu0 0
    %383 = vmatprep.mubr.bf16.mxu0 0
    %384 = vmatmul.mubr.bf16.gmra.mrb[0].mxu0 %v146
    %v385 = vpop.f32.mrb[0].mxu0
    %v386 = vadd.f32 %v133, %v385
    %v387 = vpop.f32.mrb[0].mxu0
    %v388 = vadd.f32 %v137, %v387
    %v389 = vpop.f32.mrb[0].mxu0
    %v390 = vadd.f32 %v133, %v389
    %v391 = vpop.f32.mrb[0].mxu0
    %v392 = vadd.f32 %v137, %v391
    %393 = vdwg.mxu0
    %v394 = vmul.f32 %v343, 0.5
    %v395 = vmul.f32 %v345, 0.5
    %v396 = vmul.f32 %v386, 0.5
    %v397 = vmul.f32 %v388, 0.5
    %v398 = vmul.f32 %v347, 0.5
    %v399 = vmul.f32 %v349, 0.5
    %v400 = vmul.f32 %v390, 0.5
    %v401 = vmul.f32 %v392, 0.5
    %v402 = vmul.f32 %v343, %v343
    %v403 = vmul.f32 %v345, %v345
    %v404 = vmul.f32 %v386, %v386
    %v405 = vmul.f32 %v388, %v388
    %v406 = vmul.f32 %v347, %v347
    %v407 = vmul.f32 %v349, %v349
    %v408 = vmul.f32 %v390, %v390
    %v409 = vmul.f32 %v392, %v392
    %v410 = vmul.f32 %v402, %v343
    %v411 = vmul.f32 %v403, %v345
    %v412 = vmul.f32 %v404, %v386
    %v413 = vmul.f32 %v405, %v388
    %v414 = vmul.f32 %v406, %v347
    %v415 = vmul.f32 %v407, %v349
    %v416 = vmul.f32 %v408, %v390
    %v417 = vmul.f32 %v409, %v392
    %v418 = vmul.f32 %v410, 0.044715
    %v419 = vmul.f32 %v411, 0.044715
    %v420 = vmul.f32 %v412, 0.044715
    %v421 = vmul.f32 %v413, 0.044715
    %v422 = vmul.f32 %v414, 0.044715
    %v423 = vmul.f32 %v415, 0.044715
    %v424 = vmul.f32 %v416, 0.044715
    %v425 = vmul.f32 %v417, 0.044715
    %v426 = vadd.f32 %v343, %v418
    %v427 = vadd.f32 %v345, %v419
    %v428 = vadd.f32 %v386, %v420
    %v429 = vadd.f32 %v388, %v421
    %v430 = vadd.f32 %v347, %v422
    %v431 = vadd.f32 %v349, %v423
    %v432 = vadd.f32 %v390, %v424
    %v433 = vadd.f32 %v392, %v425
    %v434 = vmul.f32 %v426, 0.7978846
    %v435 = vmul.f32 %v427, 0.7978846
    %v436 = vmul.f32 %v428, 0.7978846
    %v437 = vmul.f32 %v429, 0.7978846
    %v438 = vmul.f32 %v430, 0.7978846
    %v439 = vmul.f32 %v431, 0.7978846
    %v440 = vmul.f32 %v432, 0.7978846
    %v441 = vmul.f32 %v433, 0.7978846
    %v442 = vtanh.pop %v434
    %v443 = vtanh.pop %v435
    %v444 = vtanh.pop %v436
    %v445 = vtanh.pop %v437
    %v446 = vtanh.pop %v438
    %v447 = vtanh.pop %v439
    %v448 = vtanh.pop %v440
    %v449 = vtanh.pop %v441
    %v450 = vadd.f32 %v442, 1.0
    %v451 = vadd.f32 %v443, 1.0
    %v452 = vadd.f32 %v444, 1.0
    %v453 = vadd.f32 %v445, 1.0
    %v454 = vadd.f32 %v446, 1.0
    %v455 = vadd.f32 %v447, 1.0
    %v456 = vadd.f32 %v448, 1.0
    %v457 = vadd.f32 %v449, 1.0
    %v458 = vmul.f32 %v394, %v450
    %v459 = vmul.f32 %v395, %v451
    %v460 = vmul.f32 %v396, %v452
    %v461 = vmul.f32 %v397, %v453
    %v462 = vmul.f32 %v398, %v454
    %v463 = vmul.f32 %v399, %v455
    %v464 = vmul.f32 %v400, %v456
    %v465 = vmul.f32 %v401, %v457
    %v466 = vpack.c.bf16 %v462, %v458
    %v467 = vpack.c.bf16 %v463, %v459
    %v468 = vpack.c.bf16 %v464, %v460
    %v469 = vpack.c.bf16 %v465, %v461
    %v470 = vld [vmem:[#allocation8] sm:$0xf]
    %v471 = vld [vmem:[#allocation8 + $0x4] sm:$0xf]
    %v472 = vld [vmem:[#allocation8 + $0x8] sm:$0xf]
    %v473 = vld [vmem:[#allocation8 + $0xc] sm:$0xf]
    %v474 = vld [vmem:[#allocation8 + $0x10] sm:$0xf]
    %v475 = vld [vmem:[#allocation8 + $0x14] sm:$0xf]
    %v476 = vld [vmem:[#allocation8 + $0x18] sm:$0xf]
    %v477 = vld [vmem:[#allocation8 + $0x1c] sm:$0xf]
    %v478 = vld [vmem:[#allocation8 + $0x20] sm:$0xf]
    %v479 = vld [vmem:[#allocation8 + $0x24] sm:$0xf]
    %v480 = vld [vmem:[#allocation8 + $0x28] sm:$0xf]
    %v481 = vld [vmem:[#allocation8 + $0x2c] sm:$0xf]
    %v482 = vld [vmem:[#allocation8 + $0x30] sm:$0xf]
    %v483 = vld [vmem:[#allocation8 + $0x34] sm:$0xf]
    %v484 = vld [vmem:[#allocation8 + $0x38] sm:$0xf]
    %v485 = vld [vmem:[#allocation8 + $0x3c] sm:$0xf]
    %v486 = vld [vmem:[#allocation8 + $0x40] sm:$0xf]
    %v487 = vld [vmem:[#allocation8 + $0x44] sm:$0xf]
    %v488 = vld [vmem:[#allocation8 + $0x48] sm:$0xf]
    %v489 = vld [vmem:[#allocation8 + $0x4c] sm:$0xf]
    %v490 = vld [vmem:[#allocation8 + $0x50] sm:$0xf]
    %v491 = vld [vmem:[#allocation8 + $0x54] sm:$0xf]
    %v492 = vld [vmem:[#allocation8 + $0x58] sm:$0xf]
    %v493 = vld [vmem:[#allocation8 + $0x5c] sm:$0xf]
    %v494 = vld [vmem:[#allocation8 + $0x60] sm:$0xf]
    %v495 = vld [vmem:[#allocation8 + $0x64] sm:$0xf]
    %v496 = vld [vmem:[#allocation8 + $0x68] sm:$0xf]
    %v497 = vld [vmem:[#allocation8 + $0x6c] sm:$0xf]
    %v498 = vld [vmem:[#allocation8 + $0x70] sm:$0xf]
    %v499 = vld [vmem:[#allocation8 + $0x74] sm:$0xf]
    %v500 = vld [vmem:[#allocation8 + $0x78] sm:$0xf]
    %v501 = vld [vmem:[#allocation8 + $0x7c] sm:$0xf]
    %v502 = vld [vmem:[#allocation8 + $0x80] sm:$0xf]
    %v503 = vld [vmem:[#allocation8 + $0x84] sm:$0xf]
    %v504 = vld [vmem:[#allocation8 + $0x88] sm:$0xf]
    %v505 = vld [vmem:[#allocation8 + $0x8c] sm:$0xf]
    %v506 = vld [vmem:[#allocation8 + $0x90] sm:$0xf]
    %v507 = vld [vmem:[#allocation8 + $0x94] sm:$0xf]
    %v508 = vld [vmem:[#allocation8 + $0x98] sm:$0xf]
    %v509 = vld [vmem:[#allocation8 + $0x9c] sm:$0xf]
    %v510 = vld [vmem:[#allocation8 + $0xa0] sm:$0xf]
    %v511 = vld [vmem:[#allocation8 + $0xa4] sm:$0xf]
    %v512 = vld [vmem:[#allocation8 + $0xa8] sm:$0xf]
    %v513 = vld [vmem:[#allocation8 + $0xac] sm:$0xf]
    %v514 = vld [vmem:[#allocation8 + $0xb0] sm:$0xf]
    %v515 = vld [vmem:[#allocation8 + $0xb4] sm:$0xf]
    %v516 = vld [vmem:[#allocation8 + $0xb8] sm:$0xf]
    %v517 = vld [vmem:[#allocation8 + $0xbc] sm:$0xf]
    %v518 = vld [vmem:[#allocation8 + $0xc0] sm:$0xf]
    %v519 = vld [vmem:[#allocation8 + $0xc4] sm:$0xf]
    %v520 = vld [vmem:[#allocation8 + $0xc8] sm:$0xf]
    %v521 = vld [vmem:[#allocation8 + $0xcc] sm:$0xf]
    %v522 = vld [vmem:[#allocation8 + $0xd0] sm:$0xf]
    %v523 = vld [vmem:[#allocation8 + $0xd4] sm:$0xf]
    %v524 = vld [vmem:[#allocation8 + $0xd8] sm:$0xf]
    %v525 = vld [vmem:[#allocation8 + $0xdc] sm:$0xf]
    %v526 = vld [vmem:[#allocation8 + $0xe0] sm:$0xf]
    %v527 = vld [vmem:[#allocation8 + $0xe4] sm:$0xf]
    %v528 = vld [vmem:[#allocation8 + $0xe8] sm:$0xf]
    %v529 = vld [vmem:[#allocation8 + $0xec] sm:$0xf]
    %v530 = vld [vmem:[#allocation8 + $0xf0] sm:$0xf]
    %v531 = vld [vmem:[#allocation8 + $0xf4] sm:$0xf]
    %v532 = vld [vmem:[#allocation8 + $0xf8] sm:$0xf]
    %v533 = vld [vmem:[#allocation8 + $0xfc] sm:$0xf]
    %v534 = vld [vmem:[#allocation10] sm:$0x1]
    %v536 = vlaneseq
    %v537 = vshrl.u32 %v536, 7
    %v538 = vsub.s32 0, %v537
    %v539 = vrot.slane %v534, %v538
    %v605 = vunpack.c.l.b16 %v470
    %v606 = vunpack.c.l.b16 %v471
    %v607 = vunpack.c.l.b16 %v472
    %v608 = vunpack.c.l.b16 %v473
    %v609 = vunpack.c.l.b16 %v474
    %v610 = vunpack.c.l.b16 %v475
    %v611 = vunpack.c.l.b16 %v476
    %v612 = vunpack.c.l.b16 %v477
    %v613 = vunpack.c.l.b16 %v478
    %v614 = vunpack.c.l.b16 %v479
    %v615 = vunpack.c.l.b16 %v480
    %v616 = vunpack.c.l.b16 %v481
    %v617 = vunpack.c.l.b16 %v482
    %v618 = vunpack.c.l.b16 %v483
    %v619 = vunpack.c.l.b16 %v484
    %v620 = vunpack.c.l.b16 %v485
    %v621 = vunpack.c.l.b16 %v486
    %v622 = vunpack.c.l.b16 %v487
    %v623 = vunpack.c.l.b16 %v488
    %v624 = vunpack.c.l.b16 %v489
    %v625 = vunpack.c.l.b16 %v490
    %v626 = vunpack.c.l.b16 %v491
    %v627 = vunpack.c.l.b16 %v492
    %v628 = vunpack.c.l.b16 %v493
    %v629 = vunpack.c.l.b16 %v494
    %v630 = vunpack.c.l.b16 %v495
    %v631 = vunpack.c.l.b16 %v496
    %v632 = vunpack.c.l.b16 %v497
    %v633 = vunpack.c.l.b16 %v498
    %v634 = vunpack.c.l.b16 %v499
    %v635 = vunpack.c.l.b16 %v500
    %v636 = vunpack.c.l.b16 %v501
    %v637 = vunpack.c.l.b16 %v502
    %v638 = vunpack.c.l.b16 %v503
    %v639 = vunpack.c.l.b16 %v504
    %v640 = vunpack.c.l.b16 %v505
    %v641 = vunpack.c.l.b16 %v506
    %v642 = vunpack.c.l.b16 %v507
    %v643 = vunpack.c.l.b16 %v508
    %v644 = vunpack.c.l.b16 %v509
    %v645 = vunpack.c.l.b16 %v510
    %v646 = vunpack.c.l.b16 %v511
    %v647 = vunpack.c.l.b16 %v512
    %v648 = vunpack.c.l.b16 %v513
    %v649 = vunpack.c.l.b16 %v514
    %v650 = vunpack.c.l.b16 %v515
    %v651 = vunpack.c.l.b16 %v516
    %v652 = vunpack.c.l.b16 %v517
    %v653 = vunpack.c.l.b16 %v518
    %v654 = vunpack.c.l.b16 %v519
    %v655 = vunpack.c.l.b16 %v520
    %v656 = vunpack.c.l.b16 %v521
    %v657 = vunpack.c.l.b16 %v522
    %v658 = vunpack.c.l.b16 %v523
    %v659 = vunpack.c.l.b16 %v524
    %v660 = vunpack.c.l.b16 %v525
    %v661 = vunpack.c.l.b16 %v526
    %v662 = vunpack.c.l.b16 %v527
    %v663 = vunpack.c.l.b16 %v528
    %v664 = vunpack.c.l.b16 %v529
    %v665 = vunpack.c.l.b16 %v530
    %v666 = vunpack.c.l.b16 %v531
    %v667 = vunpack.c.l.b16 %v532
    %v668 = vunpack.c.l.b16 %v533
    %v669 = vpack.c.b16 %v606, %v605
    %v670 = vpack.c.b16 %v608, %v607
    %v671 = vpack.c.b16 %v610, %v609
    %v672 = vpack.c.b16 %v612, %v611
    %v673 = vpack.c.b16 %v614, %v613
    %v674 = vpack.c.b16 %v616, %v615
    %v675 = vpack.c.b16 %v618, %v617
    %v676 = vpack.c.b16 %v620, %v619
    %v677 = vpack.c.b16 %v622, %v621
    %v678 = vpack.c.b16 %v624, %v623
    %v679 = vpack.c.b16 %v626, %v625
    %v680 = vpack.c.b16 %v628, %v627
    %v681 = vpack.c.b16 %v630, %v629
    %v682 = vpack.c.b16 %v632, %v631
    %v683 = vpack.c.b16 %v634, %v633
    %v684 = vpack.c.b16 %v636, %v635
    %v685 = vpack.c.b16 %v638, %v637
    %v686 = vpack.c.b16 %v640, %v639
    %v687 = vpack.c.b16 %v642, %v641
    %v688 = vpack.c.b16 %v644, %v643
    %v689 = vpack.c.b16 %v646, %v645
    %v690 = vpack.c.b16 %v648, %v647
    %v691 = vpack.c.b16 %v650, %v649
    %v692 = vpack.c.b16 %v652, %v651
    %v693 = vpack.c.b16 %v654, %v653
    %v694 = vpack.c.b16 %v656, %v655
    %v695 = vpack.c.b16 %v658, %v657
    %v696 = vpack.c.b16 %v660, %v659
    %v697 = vpack.c.b16 %v662, %v661
    %v698 = vpack.c.b16 %v664, %v663
    %v699 = vpack.c.b16 %v666, %v665
    %v700 = vpack.c.b16 %v668, %v667
    %733 = vmatprep.subr.bf16.mxu0 0
    %734 = vmatpush1.bf16.msra.mxu0 %v669
    %735 = vmatprep.subr.bf16.mxu0 0
    %736 = vmatpush1.bf16.msra.mxu0 %v670
    %737 = vmatprep.subr.bf16.mxu0 0
    %738 = vmatpush1.bf16.msra.mxu0 %v671
    %739 = vmatprep.subr.bf16.mxu0 0
    %740 = vmatpush1.bf16.msra.mxu0 %v672
    %741 = vmatprep.subr.bf16.mxu0 0
    %742 = vmatpush1.bf16.msra.mxu0 %v673
    %743 = vmatprep.subr.bf16.mxu0 0
    %744 = vmatpush1.bf16.msra.mxu0 %v674
    %745 = vmatprep.subr.bf16.mxu0 0
    %746 = vmatpush1.bf16.msra.mxu0 %v675
    %747 = vmatprep.subr.bf16.mxu0 0
    %748 = vmatpush1.bf16.msra.mxu0 %v676
    %749 = vmatprep.subr.bf16.mxu0 0
    %750 = vmatpush1.bf16.msra.mxu0 %v677
    %751 = vmatprep.subr.bf16.mxu0 0
    %752 = vmatpush1.bf16.msra.mxu0 %v678
    %753 = vmatprep.subr.bf16.mxu0 0
    %754 = vmatpush1.bf16.msra.mxu0 %v679
    %755 = vmatprep.subr.bf16.mxu0 0
    %756 = vmatpush1.bf16.msra.mxu0 %v680
    %757 = vmatprep.subr.bf16.mxu0 0
    %758 = vmatpush1.bf16.msra.mxu0 %v681
    %759 = vmatprep.subr.bf16.mxu0 0
    %760 = vmatpush1.bf16.msra.mxu0 %v682
    %761 = vmatprep.subr.bf16.mxu0 0
    %762 = vmatpush1.bf16.msra.mxu0 %v683
    %763 = vmatprep.subr.bf16.mxu0 0
    %764 = vmatpush1.bf16.msra.mxu0 %v684
    %765 = vmatprep.mubr.bf16.mxu0 %v467
    %766 = vmatmul.mubr.bf16.gmra.mrb[0].mxu0 %v466
    %v767 = vpop.f32.mrb[0].mxu0
    %v768 = vadd.f32 %v539, %v767
    %v769 = vpop.f32.mrb[0].mxu0
    %v770 = vpop.f32.mrb[0].mxu0
    %v771 = vadd.f32 %v539, %v770
    %v772 = vpop.f32.mrb[0].mxu0
    %773 = vdwg.mxu0
    %774 = vmatprep.subr.bf16.mxu0 0
    %775 = vmatpush1.bf16.msra.mxu0 %v685
    %776 = vmatprep.subr.bf16.mxu0 0
    %777 = vmatpush1.bf16.msra.mxu0 %v686
    %778 = vmatprep.subr.bf16.mxu0 0
    %779 = vmatpush1.bf16.msra.mxu0 %v687
    %780 = vmatprep.subr.bf16.mxu0 0
    %781 = vmatpush1.bf16.msra.mxu0 %v688
    %782 = vmatprep.subr.bf16.mxu0 0
    %783 = vmatpush1.bf16.msra.mxu0 %v689
    %784 = vmatprep.subr.bf16.mxu0 0
    %785 = vmatpush1.bf16.msra.mxu0 %v690
    %786 = vmatprep.subr.bf16.mxu0 0
    %787 = vmatpush1.bf16.msra.mxu0 %v691
    %788 = vmatprep.subr.bf16.mxu0 0
    %789 = vmatpush1.bf16.msra.mxu0 %v692
    %790 = vmatprep.subr.bf16.mxu0 0
    %791 = vmatpush1.bf16.msra.mxu0 %v693
    %792 = vmatprep.subr.bf16.mxu0 0
    %793 = vmatpush1.bf16.msra.mxu0 %v694
    %794 = vmatprep.subr.bf16.mxu0 0
    %795 = vmatpush1.bf16.msra.mxu0 %v695
    %796 = vmatprep.subr.bf16.mxu0 0
    %797 = vmatpush1.bf16.msra.mxu0 %v696
    %798 = vmatprep.subr.bf16.mxu0 0
    %799 = vmatpush1.bf16.msra.mxu0 %v697
    %800 = vmatprep.subr.bf16.mxu0 0
    %801 = vmatpush1.bf16.msra.mxu0 %v698
    %802 = vmatprep.subr.bf16.mxu0 0
    %803 = vmatpush1.bf16.msra.mxu0 %v699
    %804 = vmatprep.subr.bf16.mxu0 0
    %805 = vmatpush1.bf16.msra.mxu0 %v700
    %806 = vmatprep.mubr.bf16.mxu0 %v469
    %807 = vmatmul.mubr.bf16.gmra.mrb[0].mxu0 %v468
    %v808 = vpop.f32.mrb[0].mxu0
    %v809 = vadd.f32 %v768, %v808
    %v810 = vpop.f32.mrb[0].mxu0
    %v811 = vpop.f32.mrb[0].mxu0
    %v812 = vadd.f32 %v771, %v811
    %v813 = vpop.f32.mrb[0].mxu0
    %814 = vdwg.mxu0
    %815 = vst [vmem:[#allocation11] sm:$0xff] %v809
    %816 = vst [vmem:[#allocation11 + $0x8] sm:$0xff] %v812
    // Predicated region
    $region42: #{tpu_custom_call.1} parent=1 // pred_check
      _
    $region43: #{tpu_custom_call.1} parent=1 // pred_check_branch
      %818 = sbr.rel (0) target = $region45
    $region44: #{tpu_custom_call.1} parent=1 // pred_region
      %s820 = ssub.s32 256, 256
      %821 = vsyncadd [#allocation4], %s820
      %s822 = sshll.u32 [#allocation11], 4
      %s823 = int_to_ptr.vmem [resolvable:$true] %s822
      %828 = dma.vmem_to_hbm [thread:$0]  %s823, 256, %s5, [#allocation4], 128, 128, 8
    $region45: #{tpu_custom_call.1} parent=1 // pred_fallthru
      _
    // Predicated region
    $region46: #{tpu_custom_call.1} parent=1 // pred_check
      _
    $region47: #{tpu_custom_call.1} parent=1 // pred_check_branch
      %830 = sbr.rel (0) target = $region49
    $region48: #{tpu_custom_call.1} parent=1 // pred_region
      %831 = dma.done [#allocation4], 256
    $region49: #{tpu_custom_call.1} parent=1 // pred_fallthru
      _
    %832 = vsyncpa [#allocation3], 1
    %833 = vsyncpa [#allocation6], 1
    %834 = vsyncpa [#allocation9], 1
    %835 = vsyncpa [#allocation4], 1

</llo_original>
